<compile_context>
chip_gen: v5e
topology: v5e:2x2
jax: 0.10.0
libtpu: 0.0.40
codegen_flags: <defaults>
</compile_context>

<pallas_src>
import math
import numpy as np
import jax
import jax.numpy as jnp
from jax.experimental import pallas as pl
from jax.experimental.pallas import tpu as pltpu


# ----------------------------------------------------------------------------
# Model configuration (mirrors ConditionConvVAE(channels=[4,8,16],
# linears=[32,16,8], input_crop=16))
# ----------------------------------------------------------------------------
CHANNELS = [4, 8, 16]
LINEARS_IN = [32, 16, 8]
INPUT_CROP = 16
KERNEL_SIZE = 5
DILATION = 1
STRIDE = 2
OUTPUT_PADDING = 1
PADDING = KERNEL_SIZE // 2
LN_EPS = 1e-5
LEAK = 0.2

PAD = 64        # every layer's feature count fits in 64 -> uniform slab slot
BBLK_MAX = 256  # batch rows per grid step (fits the 64-vreg file, no spills)


def build_config():
    conv_sizes = [INPUT_CROP]
    for _ in range(len(CHANNELS) - 1):
        cs = (conv_sizes[-1] + 2 * PADDING - DILATION * (KERNEL_SIZE - 1) - 1) / STRIDE + 1
        conv_sizes.append(math.floor(cs))
    intermediate = conv_sizes[-1] * CHANNELS[-1]
    deconv_sizes = [conv_sizes[-1]]
    for _ in range(len(CHANNELS) - 1):
        dcs = (deconv_sizes[-1] - 1) * STRIDE - 2 * PADDING \
              + DILATION * (KERNEL_SIZE - 1) + OUTPUT_PADDING + 1
        deconv_sizes.append(dcs)
    linears = [intermediate] + LINEARS_IN
    return conv_sizes, deconv_sizes, linears, linears[::-1], CHANNELS[::-1]


def xavier_normal(key, shape, fan_in, fan_out):
    std = math.sqrt(2.0 / (fan_in + fan_out))
    return std * jax.random.normal(key, shape, dtype=jnp.float32)


# ----------------------------------------------------------------------------
# Init-time lowering of Conv1d / ConvTranspose1d to dense matrices.
# ----------------------------------------------------------------------------
def _conv1d_dense(w, lin, stride, pad, in_tc_order):
    """w: (Cout, Cin, K).  Returns (Cin*Lin, Cout*Lout) matrix and Lout.

    out[co, lo] = sum_{ci,k} w[co,ci,k] * x[ci, lo*stride + k - pad].
    If in_tc_order, the input flat index is t*Cin + c (the raw (T, C) layout of
    the module input), folding the swapaxes(1, 2) into the matrix.
    """
    cout, cin, k = w.shape
    lout = (lin + 2 * pad - (k - 1) - 1) // stride + 1
    m = np.zeros((cin * lin, cout * lout), np.float32)
    for co in range(cout):
        for lo in range(lout):
            for ci in range(cin):
                for kk in range(k):
                    li = lo * stride + kk - pad
                    if 0 <= li < lin:
                        row = li * cin + ci if in_tc_order else ci * lin + li
                        m[row, co * lout + lo] += w[co, ci, kk]
    return m, lout


def _deconv1d_dense(w, lin, stride, pad, out_pad):
    """w: (Cin, Cout, K).  Returns (Cin*Lin, Cout*Lout) matrix and Lout.

    out[co, lo] = sum_{ci,li,k} x[ci,li] * w[ci,co,k]  with lo = li*stride+k-pad.
    """
    cin, cout, k = w.shape
    lout = (lin - 1) * stride - 2 * pad + (k - 1) + out_pad + 1
    m = np.zeros((cin * lin, cout * lout), np.float32)
    for ci in range(cin):
        for li in range(lin):
            for co in range(cout):
                for kk in range(k):
                    lo = li * stride + kk - pad
                    if 0 <= lo < lout:
                        m[ci * lin + li, co * lout + lo] += w[ci, co, kk]
    return m, lout


# ----------------------------------------------------------------------------
# Parameter init + packing into two contiguous slabs.
# ----------------------------------------------------------------------------
def init_model(key):
    conv_sizes, deconv_sizes, linears, dec_linears, dec_channels = build_config()
    keys = iter(jax.random.split(key, 16))
    latent = linears[-1]

    layers = []   # list of (W (in,out), bias, gamma, beta)

    # Encoder Conv1d layers -> dense matmuls ((T,C)->(C,L) folded into layer 0).
    for i in range(len(CHANNELS) - 1):
        cin, cout = CHANNELS[i], CHANNELS[i + 1]
        w = np.asarray(xavier_normal(next(keys), (cout, cin, KERNEL_SIZE),
                                     cin * KERNEL_SIZE, cout * KERNEL_SIZE))
        m, lout = _conv1d_dense(w, conv_sizes[i], STRIDE, PADDING, in_tc_order=(i == 0))
        feat = cout * lout
        layers.append((m, np.zeros(feat, np.float32),
                       np.ones(feat, np.float32), np.zeros(feat, np.float32)))

    # Encoder Linear layers (pre-transposed to (in, out)).
    for i in range(len(linears) - 2):
        fi, fo = linears[i], linears[i + 1]
        w = np.asarray(xavier_normal(next(keys), (fo, fi), fi, fo)).T
        layers.append((w, np.zeros(fo, np.float32),
                       np.ones(fo, np.float32), np.zeros(fo, np.float32)))

    n_enc = len(layers)

    # Merged mean / log-var head: h @ [mean_w.T | var_w.T] + [mean_b | var_b]
    # (no LayerNorm / activation on this layer).
    wm = np.asarray(xavier_normal(next(keys), (latent, linears[-2]), linears[-2], latent))
    wv = np.asarray(xavier_normal(next(keys), (latent, linears[-2]), linears[-2], latent))
    head_w = np.concatenate([wm.T, wv.T], axis=1)
    layers.append((head_w, np.zeros(2 * latent, np.float32),
                   np.ones(2 * latent, np.float32), np.zeros(2 * latent, np.float32)))
    head_idx = n_enc
    head_in = linears[-2]

    # Decoder Linear layers.
    for i in range(len(dec_linears) - 1):
        fi, fo = dec_linears[i], dec_linears[i + 1]
        w = np.asarray(xavier_normal(next(keys), (fo, fi), fi, fo)).T
        layers.append((w, np.zeros(fo, np.float32),
                       np.ones(fo, np.float32), np.zeros(fo, np.float32)))

    # Decoder ConvTranspose1d layers -> dense matmuls.
    for i in range(len(dec_channels) - 1):
        cin, cout = dec_channels[i], dec_channels[i + 1]
        w = np.asarray(xavier_normal(next(keys), (cin, cout, KERNEL_SIZE),
                                     cout * KERNEL_SIZE, cin * KERNEL_SIZE))
        m, lout = _deconv1d_dense(w, deconv_sizes[i], STRIDE, PADDING, OUTPUT_PADDING)
        feat = cout * lout
        b = np.zeros(feat, np.float32)
        g = np.ones(feat, np.float32)
        be = np.zeros(feat, np.float32)
        if i == len(dec_channels) - 2:
            # Fold the final crop (no-op: lout == INPUT_CROP) + (C,L)->(T,C)
            # swap into the weight columns + LN affine params (LN stats over
            # the full C*L feature set are permutation invariant -> exact).
            assert lout == INPUT_CROP
            perm = np.array([(fp % cout) * lout + (fp // cout) for fp in range(feat)])
            m, b, g, be = m[:, perm], b[perm], g[perm], be[perm]
        layers.append((m, b, g, be))

    n_layers = len(layers)

    # ---- Pack everything into two contiguous slabs (2 parameter DMAs total).
    wslab = np.zeros((n_layers, PAD, PAD), np.float32)
    pslab = np.zeros((3 * n_layers, PAD), np.float32)
    dims = []
    for li, (w, b, g, be) in enumerate(layers):
        iw, ow = w.shape
        assert iw <= PAD and ow <= PAD
        wslab[li, :iw, :ow] = w
        pslab[3 * li + 0, :ow] = b
        pslab[3 * li + 1, :ow] = g
        pslab[3 * li + 2, :ow] = be
        dims.append((iw, ow))

    params = (jnp.asarray(wslab, jnp.bfloat16),   # matmul operands: bf16 (MXU-native)
              jnp.asarray(pslab, jnp.float32))    # bias / gamma / beta: f32

    enc = [(li,) + dims[li] for li in range(n_enc)]
    dec = [(li,) + dims[li] for li in range(head_idx + 1, n_layers)]
    meta = dict(n_layers=n_layers, latent=latent,
                in_feat=dims[0][0], out_feat=dims[-1][1],
                enc=enc, dec=dec, head=head_idx, head_in=head_in)
    return params, meta


# ----------------------------------------------------------------------------
# The single fused Pallas kernel + forward wrapper.
# ----------------------------------------------------------------------------
def make_forward(meta):
    NL = meta["n_layers"]
    LATENT = meta["latent"]
    IN_FEAT = meta["in_feat"]
    OUT_FEAT = meta["out_feat"]
    ENC, DEC = meta["enc"], meta["dec"]
    HEAD, HEAD_IN = meta["head"], meta["head_in"]

    def kernel(x_ref, eps_ref, w_ref, p_ref, out_ref):
        def fused_layer(h, li, in_w, out_w):
            # matmul (bf16 operands, f32 accumulate) + bias + LayerNorm + LeakyReLU
            w = w_ref[li, :in_w, :out_w]
            y = jnp.dot(h.astype(jnp.bfloat16), w,
                        preferred_element_type=jnp.float32)
            y = y + p_ref[3 * li + 0:3 * li + 1, :out_w]
            g = p_ref[3 * li + 1:3 * li + 2, :out_w]
            b = p_ref[3 * li + 2:3 * li + 3, :out_w]
            mu = jnp.mean(y, axis=-1, keepdims=True)
            d = y - mu
            var = jnp.mean(d * d, axis=-1, keepdims=True)
            yn = d * jax.lax.rsqrt(var + LN_EPS) * g + b
            # LeakyReLU(0.2) as a single max; Dropout(0.2) is eval-mode identity.
            return jnp.maximum(yn, LEAK * yn)

        h = x_ref[...]                                    # (bblk, 64) f32
        for li, iw, ow in ENC:
            h = fused_layer(h, li, iw, ow)

        # Merged mean / log-var head, kept at the full 64 lanes (cols >= 2*latent
        # of the slab slot are zero, so mv lanes beyond 2*latent are exactly 0).
        mv = jnp.dot(h.astype(jnp.bfloat16), w_ref[HEAD, :HEAD_IN, :],
                     preferred_element_type=jnp.float32) \
             + p_ref[3 * HEAD:3 * HEAD + 1, :]
        mean = mv[:, :LATENT]
        logvar = mv[:, LATENT:2 * LATENT]
        # Fused reparameterization: z = mean + exp(logvar/2) * eps (exp -> EUP).
        h = mean + jnp.exp(0.5 * logvar) * eps_ref[...]

        for li, iw, ow in DEC:
            h = fused_layer(h, li, iw, ow)

        # Lane-dense packed output: [recon(64) | mean(8) | logvar(8) | zeros(48)]
        out_ref[...] = jnp.concatenate([h, mv], axis=-1)  # (bblk, 128), one full store

    def forward(params, x, eps):
        wslab, pslab = params
        B = x.shape[0]
        if x.shape[1] > INPUT_CROP:                       # crop is a no-op when T == 16
            x = x[:, :INPUT_CROP, :]
        x_flat = x.reshape(B, IN_FEAT).astype(jnp.float32)
        eps = eps.astype(jnp.float32)

        bblk = min(BBLK_MAX, -(-B // 8) * 8)
        b_pad = -(-B // bblk) * bblk
        if b_pad != B:
            x_flat = jnp.pad(x_flat, ((0, b_pad - B), (0, 0)))
            eps = jnp.pad(eps, ((0, b_pad - B), (0, 0)))

        out = pl.pallas_call(
            kernel,
            out_shape=jax.ShapeDtypeStruct((b_pad, 2 * PAD), jnp.float32),
            grid=(b_pad // bblk,),
            in_specs=[
                pl.BlockSpec((bblk, IN_FEAT), lambda i: (i, 0)),     # activations (pipelined)
                pl.BlockSpec((bblk, LATENT), lambda i: (i, 0)),      # eps
                pl.BlockSpec((NL, PAD, PAD), lambda i: (0, 0, 0)),   # weight slab (1 DMA)
                pl.BlockSpec((3 * NL, PAD), lambda i: (0, 0)),       # bias/gamma/beta slab (1 DMA)
            ],
            out_specs=pl.BlockSpec((bblk, 2 * PAD), lambda i: (i, 0)),
            compiler_params=pltpu.CompilerParams(
                dimension_semantics=("parallel",)),                  # 2x on v7x dual-TC
        )(x_flat, eps, wslab, pslab)

        recon = out[:B, :OUT_FEAT].reshape(B, INPUT_CROP, CHANNELS[0])
        mean = out[:B, PAD:PAD + LATENT]
        # NOTE: "var" in the torch module is the raw head output, i.e. log-variance.
        logvar = out[:B, PAD + LATENT:PAD + 2 * LATENT]
        return recon, mean, logvar

    return jax.jit(forward)


# ----------------------------------------------------------------------------
if __name__ == "__main__":
    key = jax.random.PRNGKey(0)
    k_param, k_input, k_eps = jax.random.split(key, 3)

    params, meta = init_model(k_param)
    forward = make_forward(meta)

    B = 2
    x = jax.random.normal(k_input, (B, INPUT_CROP, CHANNELS[0]), dtype=jnp.float32)
    eps = jax.random.normal(k_eps, (B, meta["latent"]), dtype=jnp.float32)

    recon, mean, var = forward(params, x, eps)
    jax.block_until_ready((recon, mean, var))

    assert recon.shape == (B, INPUT_CROP, CHANNELS[0])
    assert mean.shape == (B, LINEARS_IN[-1]) and var.shape == (B, LINEARS_IN[-1])
    assert bool(jnp.all(jnp.isfinite(recon)))
    assert bool(jnp.all(jnp.isfinite(mean))) and bool(jnp.all(jnp.isfinite(var)))
    print("KERNEL_OK")
</pallas_src>

<mosaic_0001>
module attributes {stable_mosaic.version = 11 : i64} {
  func.func @kernel(%arg0: i32, %arg1: memref<8x64xf32, #tpu.memory_space<vmem>>, %arg2: memref<8x8xf32, #tpu.memory_space<vmem>>, %arg3: memref<10x64x64xbf16, #tpu.memory_space<vmem>>, %arg4: memref<30x64xf32, #tpu.memory_space<vmem>>, %arg5: memref<8x128xf32, #tpu.memory_space<vmem>>) attributes {dimension_semantics = [#tpu.dimension_semantics<parallel>], iteration_bounds = array<i64: 1>, scalar_prefetch = 0 : i64, scratch_operands = 0 : i64, tpu.core_type = #tpu.core_type<tc>, window_params = [{transform_indices = @transform_0, window_bounds = array<i64: 8, 64>}, {transform_indices = @transform_1, window_bounds = array<i64: 8, 8>}, {pipeline_mode = #tpu.pipeline_mode<synchronous>, transform_indices = @transform_2, window_bounds = array<i64: 10, 64, 64>}, {pipeline_mode = #tpu.pipeline_mode<synchronous>, transform_indices = @transform_3, window_bounds = array<i64: 30, 64>}, {transform_indices = @transform_4, window_bounds = array<i64: 8, 128>}]} {
    %c0 = arith.constant 0 : index
    %c0_0 = arith.constant 0 : index
    %0 = vector.load %arg1[%c0, %c0_0] : memref<8x64xf32, #tpu.memory_space<vmem>>, vector<8x64xf32>
    %c0_1 = arith.constant 0 : index
    %c0_2 = arith.constant 0 : index
    %c0_3 = arith.constant 0 : index
    %1 = vector.load %arg3[%c0_1, %c0_2, %c0_3] : memref<10x64x64xbf16, #tpu.memory_space<vmem>>, vector<1x64x64xbf16>
    %2 = vector.shape_cast %1 : vector<1x64x64xbf16> to vector<64x64xbf16>
    %3 = arith.truncf %0 : vector<8x64xf32> to vector<8x64xbf16>
    %cst = arith.constant dense<0.000000e+00> : vector<8x64xf32>
    %4 = tpu.matmul %3, %2, %cst {dimension_numbers = #tpu.dot_dimension_numbers<[1], [0], [0], [1], [0, 0, 1, 1], [], []>} : vector<8x64xbf16>, vector<64x64xbf16>, vector<8x64xf32> -> vector<8x64xf32>
    %c0_4 = arith.constant 0 : index
    %c0_5 = arith.constant 0 : index
    %5 = vector.load %arg4[%c0_4, %c0_5] : memref<30x64xf32, #tpu.memory_space<vmem>>, vector<1x64xf32>
    %6 = vector.broadcast %5 : vector<1x64xf32> to vector<8x64xf32>
    %7 = arith.addf %4, %6 : vector<8x64xf32>
    %c1 = arith.constant 1 : index
    %c0_6 = arith.constant 0 : index
    %8 = vector.load %arg4[%c1, %c0_6] : memref<30x64xf32, #tpu.memory_space<vmem>>, vector<1x64xf32>
    %c2 = arith.constant 2 : index
    %c0_7 = arith.constant 0 : index
    %9 = vector.load %arg4[%c2, %c0_7] : memref<30x64xf32, #tpu.memory_space<vmem>>, vector<1x64xf32>
    %cst_8 = arith.constant dense<0.000000e+00> : vector<8xf32>
    %10 = vector.multi_reduction <add>, %7, %cst_8 [1] : vector<8x64xf32> to vector<8xf32>
    %11 = vector.shape_cast %10 : vector<8xf32> to vector<8x1xf32>
    %cst_9 = arith.constant 6.400000e+01 : f32
    %12 = vector.broadcast %cst_9 : f32 to vector<8x1xf32>
    %13 = arith.divf %11, %12 : vector<8x1xf32>
    %14 = vector.broadcast %13 : vector<8x1xf32> to vector<8x64xf32>
    %15 = arith.subf %7, %14 : vector<8x64xf32>
    %16 = arith.mulf %15, %15 : vector<8x64xf32>
    %cst_10 = arith.constant dense<0.000000e+00> : vector<8xf32>
    %17 = vector.multi_reduction <add>, %16, %cst_10 [1] : vector<8x64xf32> to vector<8xf32>
    %18 = vector.shape_cast %17 : vector<8xf32> to vector<8x1xf32>
    %cst_11 = arith.constant 6.400000e+01 : f32
    %19 = vector.broadcast %cst_11 : f32 to vector<8x1xf32>
    %20 = arith.divf %18, %19 : vector<8x1xf32>
    %cst_12 = arith.constant 9.99999974E-6 : f32
    %21 = vector.broadcast %cst_12 : f32 to vector<8x1xf32>
    %22 = arith.addf %20, %21 : vector<8x1xf32>
    %23 = math.rsqrt %22 : vector<8x1xf32>
    %24 = vector.broadcast %23 : vector<8x1xf32> to vector<8x64xf32>
    %25 = arith.mulf %15, %24 : vector<8x64xf32>
    %26 = vector.broadcast %8 : vector<1x64xf32> to vector<8x64xf32>
    %27 = arith.mulf %25, %26 : vector<8x64xf32>
    %28 = vector.broadcast %9 : vector<1x64xf32> to vector<8x64xf32>
    %29 = arith.addf %27, %28 : vector<8x64xf32>
    %cst_13 = arith.constant 2.000000e-01 : f32
    %30 = vector.broadcast %cst_13 : f32 to vector<8x64xf32>
    %31 = arith.mulf %30, %29 : vector<8x64xf32>
    %32 = arith.maximumf %29, %31 : vector<8x64xf32>
    %c1_14 = arith.constant 1 : index
    %c0_15 = arith.constant 0 : index
    %c0_16 = arith.constant 0 : index
    %33 = vector.load %arg3[%c1_14, %c0_15, %c0_16] : memref<10x64x64xbf16, #tpu.memory_space<vmem>>, vector<1x64x64xbf16>
    %34 = vector.shape_cast %33 : vector<1x64x64xbf16> to vector<64x64xbf16>
    %35 = arith.truncf %32 : vector<8x64xf32> to vector<8x64xbf16>
    %cst_17 = arith.constant dense<0.000000e+00> : vector<8x64xf32>
    %36 = tpu.matmul %35, %34, %cst_17 {dimension_numbers = #tpu.dot_dimension_numbers<[1], [0], [0], [1], [0, 0, 1, 1], [], []>} : vector<8x64xbf16>, vector<64x64xbf16>, vector<8x64xf32> -> vector<8x64xf32>
    %c3 = arith.constant 3 : index
    %c0_18 = arith.constant 0 : index
    %37 = vector.load %arg4[%c3, %c0_18] : memref<30x64xf32, #tpu.memory_space<vmem>>, vector<1x64xf32>
    %38 = vector.broadcast %37 : vector<1x64xf32> to vector<8x64xf32>
    %39 = arith.addf %36, %38 : vector<8x64xf32>
    %c4 = arith.constant 4 : index
    %c0_19 = arith.constant 0 : index
    %40 = vector.load %arg4[%c4, %c0_19] : memref<30x64xf32, #tpu.memory_space<vmem>>, vector<1x64xf32>
    %c5 = arith.constant 5 : index
    %c0_20 = arith.constant 0 : index
    %41 = vector.load %arg4[%c5, %c0_20] : memref<30x64xf32, #tpu.memory_space<vmem>>, vector<1x64xf32>
    %cst_21 = arith.constant dense<0.000000e+00> : vector<8xf32>
    %42 = vector.multi_reduction <add>, %39, %cst_21 [1] : vector<8x64xf32> to vector<8xf32>
    %43 = vector.shape_cast %42 : vector<8xf32> to vector<8x1xf32>
    %cst_22 = arith.constant 6.400000e+01 : f32
    %44 = vector.broadcast %cst_22 : f32 to vector<8x1xf32>
    %45 = arith.divf %43, %44 : vector<8x1xf32>
    %46 = vector.broadcast %45 : vector<8x1xf32> to vector<8x64xf32>
    %47 = arith.subf %39, %46 : vector<8x64xf32>
    %48 = arith.mulf %47, %47 : vector<8x64xf32>
    %cst_23 = arith.constant dense<0.000000e+00> : vector<8xf32>
    %49 = vector.multi_reduction <add>, %48, %cst_23 [1] : vector<8x64xf32> to vector<8xf32>
    %50 = vector.shape_cast %49 : vector<8xf32> to vector<8x1xf32>
    %cst_24 = arith.constant 6.400000e+01 : f32
    %51 = vector.broadcast %cst_24 : f32 to vector<8x1xf32>
    %52 = arith.divf %50, %51 : vector<8x1xf32>
    %cst_25 = arith.constant 9.99999974E-6 : f32
    %53 = vector.broadcast %cst_25 : f32 to vector<8x1xf32>
    %54 = arith.addf %52, %53 : vector<8x1xf32>
    %55 = math.rsqrt %54 : vector<8x1xf32>
    %56 = vector.broadcast %55 : vector<8x1xf32> to vector<8x64xf32>
    %57 = arith.mulf %47, %56 : vector<8x64xf32>
    %58 = vector.broadcast %40 : vector<1x64xf32> to vector<8x64xf32>
    %59 = arith.mulf %57, %58 : vector<8x64xf32>
    %60 = vector.broadcast %41 : vector<1x64xf32> to vector<8x64xf32>
    %61 = arith.addf %59, %60 : vector<8x64xf32>
    %cst_26 = arith.constant 2.000000e-01 : f32
    %62 = vector.broadcast %cst_26 : f32 to vector<8x64xf32>
    %63 = arith.mulf %62, %61 : vector<8x64xf32>
    %64 = arith.maximumf %61, %63 : vector<8x64xf32>
    %c2_27 = arith.constant 2 : index
    %c0_28 = arith.constant 0 : index
    %c0_29 = arith.constant 0 : index
    %65 = vector.load %arg3[%c2_27, %c0_28, %c0_29] : memref<10x64x64xbf16, #tpu.memory_space<vmem>>, vector<1x64x32xbf16>
    %66 = vector.shape_cast %65 : vector<1x64x32xbf16> to vector<64x32xbf16>
    %67 = arith.truncf %64 : vector<8x64xf32> to vector<8x64xbf16>
    %cst_30 = arith.constant dense<0.000000e+00> : vector<8x32xf32>
    %68 = tpu.matmul %67, %66, %cst_30 {dimension_numbers = #tpu.dot_dimension_numbers<[1], [0], [0], [1], [0, 0, 1, 1], [], []>} : vector<8x64xbf16>, vector<64x32xbf16>, vector<8x32xf32> -> vector<8x32xf32>
    %c6 = arith.constant 6 : index
    %c0_31 = arith.constant 0 : index
    %69 = vector.load %arg4[%c6, %c0_31] : memref<30x64xf32, #tpu.memory_space<vmem>>, vector<1x32xf32>
    %70 = vector.broadcast %69 : vector<1x32xf32> to vector<8x32xf32>
    %71 = arith.addf %68, %70 : vector<8x32xf32>
    %c7 = arith.constant 7 : index
    %c0_32 = arith.constant 0 : index
    %72 = vector.load %arg4[%c7, %c0_32] : memref<30x64xf32, #tpu.memory_space<vmem>>, vector<1x32xf32>
    %c8 = arith.constant 8 : index
    %c0_33 = arith.constant 0 : index
    %73 = vector.load %arg4[%c8, %c0_33] : memref<30x64xf32, #tpu.memory_space<vmem>>, vector<1x32xf32>
    %cst_34 = arith.constant dense<0.000000e+00> : vector<8xf32>
    %74 = vector.multi_reduction <add>, %71, %cst_34 [1] : vector<8x32xf32> to vector<8xf32>
    %75 = vector.shape_cast %74 : vector<8xf32> to vector<8x1xf32>
    %cst_35 = arith.constant 3.200000e+01 : f32
    %76 = vector.broadcast %cst_35 : f32 to vector<8x1xf32>
    %77 = arith.divf %75, %76 : vector<8x1xf32>
    %78 = vector.broadcast %77 : vector<8x1xf32> to vector<8x32xf32>
    %79 = arith.subf %71, %78 : vector<8x32xf32>
    %80 = arith.mulf %79, %79 : vector<8x32xf32>
    %cst_36 = arith.constant dense<0.000000e+00> : vector<8xf32>
    %81 = vector.multi_reduction <add>, %80, %cst_36 [1] : vector<8x32xf32> to vector<8xf32>
    %82 = vector.shape_cast %81 : vector<8xf32> to vector<8x1xf32>
    %cst_37 = arith.constant 3.200000e+01 : f32
    %83 = vector.broadcast %cst_37 : f32 to vector<8x1xf32>
    %84 = arith.divf %82, %83 : vector<8x1xf32>
    %cst_38 = arith.constant 9.99999974E-6 : f32
    %85 = vector.broadcast %cst_38 : f32 to vector<8x1xf32>
    %86 = arith.addf %84, %85 : vector<8x1xf32>
    %87 = math.rsqrt %86 : vector<8x1xf32>
    %88 = vector.broadcast %87 : vector<8x1xf32> to vector<8x32xf32>
    %89 = arith.mulf %79, %88 : vector<8x32xf32>
    %90 = vector.broadcast %72 : vector<1x32xf32> to vector<8x32xf32>
    %91 = arith.mulf %89, %90 : vector<8x32xf32>
    %92 = vector.broadcast %73 : vector<1x32xf32> to vector<8x32xf32>
    %93 = arith.addf %91, %92 : vector<8x32xf32>
    %cst_39 = arith.constant 2.000000e-01 : f32
    %94 = vector.broadcast %cst_39 : f32 to vector<8x32xf32>
    %95 = arith.mulf %94, %93 : vector<8x32xf32>
    %96 = arith.maximumf %93, %95 : vector<8x32xf32>
    %c3_40 = arith.constant 3 : index
    %c0_41 = arith.constant 0 : index
    %c0_42 = arith.constant 0 : index
    %97 = vector.load %arg3[%c3_40, %c0_41, %c0_42] : memref<10x64x64xbf16, #tpu.memory_space<vmem>>, vector<1x32x16xbf16>
    %98 = vector.shape_cast %97 : vector<1x32x16xbf16> to vector<32x16xbf16>
    %99 = arith.truncf %96 : vector<8x32xf32> to vector<8x32xbf16>
    %cst_43 = arith.constant dense<0.000000e+00> : vector<8x16xf32>
    %100 = tpu.matmul %99, %98, %cst_43 {dimension_numbers = #tpu.dot_dimension_numbers<[1], [0], [0], [1], [0, 0, 1, 1], [], []>} : vector<8x32xbf16>, vector<32x16xbf16>, vector<8x16xf32> -> vector<8x16xf32>
    %c9 = arith.constant 9 : index
    %c0_44 = arith.constant 0 : index
    %101 = vector.load %arg4[%c9, %c0_44] : memref<30x64xf32, #tpu.memory_space<vmem>>, vector<1x16xf32>
    %102 = vector.broadcast %101 : vector<1x16xf32> to vector<8x16xf32>
    %103 = arith.addf %100, %102 : vector<8x16xf32>
    %c10 = arith.constant 10 : index
    %c0_45 = arith.constant 0 : index
    %104 = vector.load %arg4[%c10, %c0_45] : memref<30x64xf32, #tpu.memory_space<vmem>>, vector<1x16xf32>
    %c11 = arith.constant 11 : index
    %c0_46 = arith.constant 0 : index
    %105 = vector.load %arg4[%c11, %c0_46] : memref<30x64xf32, #tpu.memory_space<vmem>>, vector<1x16xf32>
    %cst_47 = arith.constant dense<0.000000e+00> : vector<8xf32>
    %106 = vector.multi_reduction <add>, %103, %cst_47 [1] : vector<8x16xf32> to vector<8xf32>
    %107 = vector.shape_cast %106 : vector<8xf32> to vector<8x1xf32>
    %cst_48 = arith.constant 1.600000e+01 : f32
    %108 = vector.broadcast %cst_48 : f32 to vector<8x1xf32>
    %109 = arith.divf %107, %108 : vector<8x1xf32>
    %110 = vector.broadcast %109 : vector<8x1xf32> to vector<8x16xf32>
    %111 = arith.subf %103, %110 : vector<8x16xf32>
    %112 = arith.mulf %111, %111 : vector<8x16xf32>
    %cst_49 = arith.constant dense<0.000000e+00> : vector<8xf32>
    %113 = vector.multi_reduction <add>, %112, %cst_49 [1] : vector<8x16xf32> to vector<8xf32>
    %114 = vector.shape_cast %113 : vector<8xf32> to vector<8x1xf32>
    %cst_50 = arith.constant 1.600000e+01 : f32
    %115 = vector.broadcast %cst_50 : f32 to vector<8x1xf32>
    %116 = arith.divf %114, %115 : vector<8x1xf32>
    %cst_51 = arith.constant 9.99999974E-6 : f32
    %117 = vector.broadcast %cst_51 : f32 to vector<8x1xf32>
    %118 = arith.addf %116, %117 : vector<8x1xf32>
    %119 = math.rsqrt %118 : vector<8x1xf32>
    %120 = vector.broadcast %119 : vector<8x1xf32> to vector<8x16xf32>
    %121 = arith.mulf %111, %120 : vector<8x16xf32>
    %122 = vector.broadcast %104 : vector<1x16xf32> to vector<8x16xf32>
    %123 = arith.mulf %121, %122 : vector<8x16xf32>
    %124 = vector.broadcast %105 : vector<1x16xf32> to vector<8x16xf32>
    %125 = arith.addf %123, %124 : vector<8x16xf32>
    %cst_52 = arith.constant 2.000000e-01 : f32
    %126 = vector.broadcast %cst_52 : f32 to vector<8x16xf32>
    %127 = arith.mulf %126, %125 : vector<8x16xf32>
    %128 = arith.maximumf %125, %127 : vector<8x16xf32>
    %129 = arith.truncf %128 : vector<8x16xf32> to vector<8x16xbf16>
    %c4_53 = arith.constant 4 : index
    %c0_54 = arith.constant 0 : index
    %c0_55 = arith.constant 0 : index
    %130 = vector.load %arg3[%c4_53, %c0_54, %c0_55] : memref<10x64x64xbf16, #tpu.memory_space<vmem>>, vector<1x16x64xbf16>
    %131 = vector.shape_cast %130 : vector<1x16x64xbf16> to vector<16x64xbf16>
    %cst_56 = arith.constant dense<0.000000e+00> : vector<8x64xf32>
    %132 = tpu.matmul %129, %131, %cst_56 {dimension_numbers = #tpu.dot_dimension_numbers<[1], [0], [0], [1], [0, 0, 1, 1], [], []>} : vector<8x16xbf16>, vector<16x64xbf16>, vector<8x64xf32> -> vector<8x64xf32>
    %c12 = arith.constant 12 : index
    %c0_57 = arith.constant 0 : index
    %133 = vector.load %arg4[%c12, %c0_57] : memref<30x64xf32, #tpu.memory_space<vmem>>, vector<1x64xf32>
    %134 = vector.broadcast %133 : vector<1x64xf32> to vector<8x64xf32>
    %135 = arith.addf %132, %134 : vector<8x64xf32>
    %136 = vector.extract_strided_slice %135 {offsets = [0, 0], sizes = [8, 8], strides = [1, 1]} : vector<8x64xf32> to vector<8x8xf32>
    %137 = vector.extract_strided_slice %135 {offsets = [0, 8], sizes = [8, 8], strides = [1, 1]} : vector<8x64xf32> to vector<8x8xf32>
    %cst_58 = arith.constant 5.000000e-01 : f32
    %138 = vector.broadcast %cst_58 : f32 to vector<8x8xf32>
    %139 = arith.mulf %138, %137 : vector<8x8xf32>
    %140 = math.exp %139 : vector<8x8xf32>
    %c0_59 = arith.constant 0 : index
    %c0_60 = arith.constant 0 : index
    %141 = vector.load %arg2[%c0_59, %c0_60] : memref<8x8xf32, #tpu.memory_space<vmem>>, vector<8x8xf32>
    %142 = arith.mulf %140, %141 : vector<8x8xf32>
    %143 = arith.addf %136, %142 : vector<8x8xf32>
    %c5_61 = arith.constant 5 : index
    %c0_62 = arith.constant 0 : index
    %c0_63 = arith.constant 0 : index
    %144 = vector.load %arg3[%c5_61, %c0_62, %c0_63] : memref<10x64x64xbf16, #tpu.memory_space<vmem>>, vector<1x8x16xbf16>
    %145 = vector.shape_cast %144 : vector<1x8x16xbf16> to vector<8x16xbf16>
    %146 = arith.truncf %143 : vector<8x8xf32> to vector<8x8xbf16>
    %cst_64 = arith.constant dense<0.000000e+00> : vector<8x16xf32>
    %147 = tpu.matmul %146, %145, %cst_64 {dimension_numbers = #tpu.dot_dimension_numbers<[1], [0], [0], [1], [0, 0, 1, 1], [], []>} : vector<8x8xbf16>, vector<8x16xbf16>, vector<8x16xf32> -> vector<8x16xf32>
    %c15 = arith.constant 15 : index
    %c0_65 = arith.constant 0 : index
    %148 = vector.load %arg4[%c15, %c0_65] : memref<30x64xf32, #tpu.memory_space<vmem>>, vector<1x16xf32>
    %149 = vector.broadcast %148 : vector<1x16xf32> to vector<8x16xf32>
    %150 = arith.addf %147, %149 : vector<8x16xf32>
    %c16 = arith.constant 16 : index
    %c0_66 = arith.constant 0 : index
    %151 = vector.load %arg4[%c16, %c0_66] : memref<30x64xf32, #tpu.memory_space<vmem>>, vector<1x16xf32>
    %c17 = arith.constant 17 : index
    %c0_67 = arith.constant 0 : index
    %152 = vector.load %arg4[%c17, %c0_67] : memref<30x64xf32, #tpu.memory_space<vmem>>, vector<1x16xf32>
    %cst_68 = arith.constant dense<0.000000e+00> : vector<8xf32>
    %153 = vector.multi_reduction <add>, %150, %cst_68 [1] : vector<8x16xf32> to vector<8xf32>
    %154 = vector.shape_cast %153 : vector<8xf32> to vector<8x1xf32>
    %cst_69 = arith.constant 1.600000e+01 : f32
    %155 = vector.broadcast %cst_69 : f32 to vector<8x1xf32>
    %156 = arith.divf %154, %155 : vector<8x1xf32>
    %157 = vector.broadcast %156 : vector<8x1xf32> to vector<8x16xf32>
    %158 = arith.subf %150, %157 : vector<8x16xf32>
    %159 = arith.mulf %158, %158 : vector<8x16xf32>
    %cst_70 = arith.constant dense<0.000000e+00> : vector<8xf32>
    %160 = vector.multi_reduction <add>, %159, %cst_70 [1] : vector<8x16xf32> to vector<8xf32>
    %161 = vector.shape_cast %160 : vector<8xf32> to vector<8x1xf32>
    %cst_71 = arith.constant 1.600000e+01 : f32
    %162 = vector.broadcast %cst_71 : f32 to vector<8x1xf32>
    %163 = arith.divf %161, %162 : vector<8x1xf32>
    %cst_72 = arith.constant 9.99999974E-6 : f32
    %164 = vector.broadcast %cst_72 : f32 to vector<8x1xf32>
    %165 = arith.addf %163, %164 : vector<8x1xf32>
    %166 = math.rsqrt %165 : vector<8x1xf32>
    %167 = vector.broadcast %166 : vector<8x1xf32> to vector<8x16xf32>
    %168 = arith.mulf %158, %167 : vector<8x16xf32>
    %169 = vector.broadcast %151 : vector<1x16xf32> to vector<8x16xf32>
    %170 = arith.mulf %168, %169 : vector<8x16xf32>
    %171 = vector.broadcast %152 : vector<1x16xf32> to vector<8x16xf32>
    %172 = arith.addf %170, %171 : vector<8x16xf32>
    %cst_73 = arith.constant 2.000000e-01 : f32
    %173 = vector.broadcast %cst_73 : f32 to vector<8x16xf32>
    %174 = arith.mulf %173, %172 : vector<8x16xf32>
    %175 = arith.maximumf %172, %174 : vector<8x16xf32>
    %c6_74 = arith.constant 6 : index
    %c0_75 = arith.constant 0 : index
    %c0_76 = arith.constant 0 : index
    %176 = vector.load %arg3[%c6_74, %c0_75, %c0_76] : memref<10x64x64xbf16, #tpu.memory_space<vmem>>, vector<1x16x32xbf16>
    %177 = vector.shape_cast %176 : vector<1x16x32xbf16> to vector<16x32xbf16>
    %178 = arith.truncf %175 : vector<8x16xf32> to vector<8x16xbf16>
    %cst_77 = arith.constant dense<0.000000e+00> : vector<8x32xf32>
    %179 = tpu.matmul %178, %177, %cst_77 {dimension_numbers = #tpu.dot_dimension_numbers<[1], [0], [0], [1], [0, 0, 1, 1], [], []>} : vector<8x16xbf16>, vector<16x32xbf16>, vector<8x32xf32> -> vector<8x32xf32>
    %c18 = arith.constant 18 : index
    %c0_78 = arith.constant 0 : index
    %180 = vector.load %arg4[%c18, %c0_78] : memref<30x64xf32, #tpu.memory_space<vmem>>, vector<1x32xf32>
    %181 = vector.broadcast %180 : vector<1x32xf32> to vector<8x32xf32>
    %182 = arith.addf %179, %181 : vector<8x32xf32>
    %c19 = arith.constant 19 : index
    %c0_79 = arith.constant 0 : index
    %183 = vector.load %arg4[%c19, %c0_79] : memref<30x64xf32, #tpu.memory_space<vmem>>, vector<1x32xf32>
    %c20 = arith.constant 20 : index
    %c0_80 = arith.constant 0 : index
    %184 = vector.load %arg4[%c20, %c0_80] : memref<30x64xf32, #tpu.memory_space<vmem>>, vector<1x32xf32>
    %cst_81 = arith.constant dense<0.000000e+00> : vector<8xf32>
    %185 = vector.multi_reduction <add>, %182, %cst_81 [1] : vector<8x32xf32> to vector<8xf32>
    %186 = vector.shape_cast %185 : vector<8xf32> to vector<8x1xf32>
    %cst_82 = arith.constant 3.200000e+01 : f32
    %187 = vector.broadcast %cst_82 : f32 to vector<8x1xf32>
    %188 = arith.divf %186, %187 : vector<8x1xf32>
    %189 = vector.broadcast %188 : vector<8x1xf32> to vector<8x32xf32>
    %190 = arith.subf %182, %189 : vector<8x32xf32>
    %191 = arith.mulf %190, %190 : vector<8x32xf32>
    %cst_83 = arith.constant dense<0.000000e+00> : vector<8xf32>
    %192 = vector.multi_reduction <add>, %191, %cst_83 [1] : vector<8x32xf32> to vector<8xf32>
    %193 = vector.shape_cast %192 : vector<8xf32> to vector<8x1xf32>
    %cst_84 = arith.constant 3.200000e+01 : f32
    %194 = vector.broadcast %cst_84 : f32 to vector<8x1xf32>
    %195 = arith.divf %193, %194 : vector<8x1xf32>
    %cst_85 = arith.constant 9.99999974E-6 : f32
    %196 = vector.broadcast %cst_85 : f32 to vector<8x1xf32>
    %197 = arith.addf %195, %196 : vector<8x1xf32>
    %198 = math.rsqrt %197 : vector<8x1xf32>
    %199 = vector.broadcast %198 : vector<8x1xf32> to vector<8x32xf32>
    %200 = arith.mulf %190, %199 : vector<8x32xf32>
    %201 = vector.broadcast %183 : vector<1x32xf32> to vector<8x32xf32>
    %202 = arith.mulf %200, %201 : vector<8x32xf32>
    %203 = vector.broadcast %184 : vector<1x32xf32> to vector<8x32xf32>
    %204 = arith.addf %202, %203 : vector<8x32xf32>
    %cst_86 = arith.constant 2.000000e-01 : f32
    %205 = vector.broadcast %cst_86 : f32 to vector<8x32xf32>
    %206 = arith.mulf %205, %204 : vector<8x32xf32>
    %207 = arith.maximumf %204, %206 : vector<8x32xf32>
    %c7_87 = arith.constant 7 : index
    %c0_88 = arith.constant 0 : index
    %c0_89 = arith.constant 0 : index
    %208 = vector.load %arg3[%c7_87, %c0_88, %c0_89] : memref<10x64x64xbf16, #tpu.memory_space<vmem>>, vector<1x32x64xbf16>
    %209 = vector.shape_cast %208 : vector<1x32x64xbf16> to vector<32x64xbf16>
    %210 = arith.truncf %207 : vector<8x32xf32> to vector<8x32xbf16>
    %cst_90 = arith.constant dense<0.000000e+00> : vector<8x64xf32>
    %211 = tpu.matmul %210, %209, %cst_90 {dimension_numbers = #tpu.dot_dimension_numbers<[1], [0], [0], [1], [0, 0, 1, 1], [], []>} : vector<8x32xbf16>, vector<32x64xbf16>, vector<8x64xf32> -> vector<8x64xf32>
    %c21 = arith.constant 21 : index
    %c0_91 = arith.constant 0 : index
    %212 = vector.load %arg4[%c21, %c0_91] : memref<30x64xf32, #tpu.memory_space<vmem>>, vector<1x64xf32>
    %213 = vector.broadcast %212 : vector<1x64xf32> to vector<8x64xf32>
    %214 = arith.addf %211, %213 : vector<8x64xf32>
    %c22 = arith.constant 22 : index
    %c0_92 = arith.constant 0 : index
    %215 = vector.load %arg4[%c22, %c0_92] : memref<30x64xf32, #tpu.memory_space<vmem>>, vector<1x64xf32>
    %c23 = arith.constant 23 : index
    %c0_93 = arith.constant 0 : index
    %216 = vector.load %arg4[%c23, %c0_93] : memref<30x64xf32, #tpu.memory_space<vmem>>, vector<1x64xf32>
    %cst_94 = arith.constant dense<0.000000e+00> : vector<8xf32>
    %217 = vector.multi_reduction <add>, %214, %cst_94 [1] : vector<8x64xf32> to vector<8xf32>
    %218 = vector.shape_cast %217 : vector<8xf32> to vector<8x1xf32>
    %cst_95 = arith.constant 6.400000e+01 : f32
    %219 = vector.broadcast %cst_95 : f32 to vector<8x1xf32>
    %220 = arith.divf %218, %219 : vector<8x1xf32>
    %221 = vector.broadcast %220 : vector<8x1xf32> to vector<8x64xf32>
    %222 = arith.subf %214, %221 : vector<8x64xf32>
    %223 = arith.mulf %222, %222 : vector<8x64xf32>
    %cst_96 = arith.constant dense<0.000000e+00> : vector<8xf32>
    %224 = vector.multi_reduction <add>, %223, %cst_96 [1] : vector<8x64xf32> to vector<8xf32>
    %225 = vector.shape_cast %224 : vector<8xf32> to vector<8x1xf32>
    %cst_97 = arith.constant 6.400000e+01 : f32
    %226 = vector.broadcast %cst_97 : f32 to vector<8x1xf32>
    %227 = arith.divf %225, %226 : vector<8x1xf32>
    %cst_98 = arith.constant 9.99999974E-6 : f32
    %228 = vector.broadcast %cst_98 : f32 to vector<8x1xf32>
    %229 = arith.addf %227, %228 : vector<8x1xf32>
    %230 = math.rsqrt %229 : vector<8x1xf32>
    %231 = vector.broadcast %230 : vector<8x1xf32> to vector<8x64xf32>
    %232 = arith.mulf %222, %231 : vector<8x64xf32>
    %233 = vector.broadcast %215 : vector<1x64xf32> to vector<8x64xf32>
    %234 = arith.mulf %232, %233 : vector<8x64xf32>
    %235 = vector.broadcast %216 : vector<1x64xf32> to vector<8x64xf32>
    %236 = arith.addf %234, %235 : vector<8x64xf32>
    %cst_99 = arith.constant 2.000000e-01 : f32
    %237 = vector.broadcast %cst_99 : f32 to vector<8x64xf32>
    %238 = arith.mulf %237, %236 : vector<8x64xf32>
    %239 = arith.maximumf %236, %238 : vector<8x64xf32>
    %c8_100 = arith.constant 8 : index
    %c0_101 = arith.constant 0 : index
    %c0_102 = arith.constant 0 : index
    %240 = vector.load %arg3[%c8_100, %c0_101, %c0_102] : memref<10x64x64xbf16, #tpu.memory_space<vmem>>, vector<1x64x64xbf16>
    %241 = vector.shape_cast %240 : vector<1x64x64xbf16> to vector<64x64xbf16>
    %242 = arith.truncf %239 : vector<8x64xf32> to vector<8x64xbf16>
    %cst_103 = arith.constant dense<0.000000e+00> : vector<8x64xf32>
    %243 = tpu.matmul %242, %241, %cst_103 {dimension_numbers = #tpu.dot_dimension_numbers<[1], [0], [0], [1], [0, 0, 1, 1], [], []>} : vector<8x64xbf16>, vector<64x64xbf16>, vector<8x64xf32> -> vector<8x64xf32>
    %c24 = arith.constant 24 : index
    %c0_104 = arith.constant 0 : index
    %244 = vector.load %arg4[%c24, %c0_104] : memref<30x64xf32, #tpu.memory_space<vmem>>, vector<1x64xf32>
    %245 = vector.broadcast %244 : vector<1x64xf32> to vector<8x64xf32>
    %246 = arith.addf %243, %245 : vector<8x64xf32>
    %c25 = arith.constant 25 : index
    %c0_105 = arith.constant 0 : index
    %247 = vector.load %arg4[%c25, %c0_105] : memref<30x64xf32, #tpu.memory_space<vmem>>, vector<1x64xf32>
    %c26 = arith.constant 26 : index
    %c0_106 = arith.constant 0 : index
    %248 = vector.load %arg4[%c26, %c0_106] : memref<30x64xf32, #tpu.memory_space<vmem>>, vector<1x64xf32>
    %cst_107 = arith.constant dense<0.000000e+00> : vector<8xf32>
    %249 = vector.multi_reduction <add>, %246, %cst_107 [1] : vector<8x64xf32> to vector<8xf32>
    %250 = vector.shape_cast %249 : vector<8xf32> to vector<8x1xf32>
    %cst_108 = arith.constant 6.400000e+01 : f32
    %251 = vector.broadcast %cst_108 : f32 to vector<8x1xf32>
    %252 = arith.divf %250, %251 : vector<8x1xf32>
    %253 = vector.broadcast %252 : vector<8x1xf32> to vector<8x64xf32>
    %254 = arith.subf %246, %253 : vector<8x64xf32>
    %255 = arith.mulf %254, %254 : vector<8x64xf32>
    %cst_109 = arith.constant dense<0.000000e+00> : vector<8xf32>
    %256 = vector.multi_reduction <add>, %255, %cst_109 [1] : vector<8x64xf32> to vector<8xf32>
    %257 = vector.shape_cast %256 : vector<8xf32> to vector<8x1xf32>
    %cst_110 = arith.constant 6.400000e+01 : f32
    %258 = vector.broadcast %cst_110 : f32 to vector<8x1xf32>
    %259 = arith.divf %257, %258 : vector<8x1xf32>
    %cst_111 = arith.constant 9.99999974E-6 : f32
    %260 = vector.broadcast %cst_111 : f32 to vector<8x1xf32>
    %261 = arith.addf %259, %260 : vector<8x1xf32>
    %262 = math.rsqrt %261 : vector<8x1xf32>
    %263 = vector.broadcast %262 : vector<8x1xf32> to vector<8x64xf32>
    %264 = arith.mulf %254, %263 : vector<8x64xf32>
    %265 = vector.broadcast %247 : vector<1x64xf32> to vector<8x64xf32>
    %266 = arith.mulf %264, %265 : vector<8x64xf32>
    %267 = vector.broadcast %248 : vector<1x64xf32> to vector<8x64xf32>
    %268 = arith.addf %266, %267 : vector<8x64xf32>
    %cst_112 = arith.constant 2.000000e-01 : f32
    %269 = vector.broadcast %cst_112 : f32 to vector<8x64xf32>
    %270 = arith.mulf %269, %268 : vector<8x64xf32>
    %271 = arith.maximumf %268, %270 : vector<8x64xf32>
    %c9_113 = arith.constant 9 : index
    %c0_114 = arith.constant 0 : index
    %c0_115 = arith.constant 0 : index
    %272 = vector.load %arg3[%c9_113, %c0_114, %c0_115] : memref<10x64x64xbf16, #tpu.memory_space<vmem>>, vector<1x64x64xbf16>
    %273 = vector.shape_cast %272 : vector<1x64x64xbf16> to vector<64x64xbf16>
    %274 = arith.truncf %271 : vector<8x64xf32> to vector<8x64xbf16>
    %cst_116 = arith.constant dense<0.000000e+00> : vector<8x64xf32>
    %275 = tpu.matmul %274, %273, %cst_116 {dimension_numbers = #tpu.dot_dimension_numbers<[1], [0], [0], [1], [0, 0, 1, 1], [], []>} : vector<8x64xbf16>, vector<64x64xbf16>, vector<8x64xf32> -> vector<8x64xf32>
    %c27 = arith.constant 27 : index
    %c0_117 = arith.constant 0 : index
    %276 = vector.load %arg4[%c27, %c0_117] : memref<30x64xf32, #tpu.memory_space<vmem>>, vector<1x64xf32>
    %277 = vector.broadcast %276 : vector<1x64xf32> to vector<8x64xf32>
    %278 = arith.addf %275, %277 : vector<8x64xf32>
    %c28 = arith.constant 28 : index
    %c0_118 = arith.constant 0 : index
    %279 = vector.load %arg4[%c28, %c0_118] : memref<30x64xf32, #tpu.memory_space<vmem>>, vector<1x64xf32>
    %c29 = arith.constant 29 : index
    %c0_119 = arith.constant 0 : index
    %280 = vector.load %arg4[%c29, %c0_119] : memref<30x64xf32, #tpu.memory_space<vmem>>, vector<1x64xf32>
    %cst_120 = arith.constant dense<0.000000e+00> : vector<8xf32>
    %281 = vector.multi_reduction <add>, %278, %cst_120 [1] : vector<8x64xf32> to vector<8xf32>
    %282 = vector.shape_cast %281 : vector<8xf32> to vector<8x1xf32>
    %cst_121 = arith.constant 6.400000e+01 : f32
    %283 = vector.broadcast %cst_121 : f32 to vector<8x1xf32>
    %284 = arith.divf %282, %283 : vector<8x1xf32>
    %285 = vector.broadcast %284 : vector<8x1xf32> to vector<8x64xf32>
    %286 = arith.subf %278, %285 : vector<8x64xf32>
    %287 = arith.mulf %286, %286 : vector<8x64xf32>
    %cst_122 = arith.constant dense<0.000000e+00> : vector<8xf32>
    %288 = vector.multi_reduction <add>, %287, %cst_122 [1] : vector<8x64xf32> to vector<8xf32>
    %289 = vector.shape_cast %288 : vector<8xf32> to vector<8x1xf32>
    %cst_123 = arith.constant 6.400000e+01 : f32
    %290 = vector.broadcast %cst_123 : f32 to vector<8x1xf32>
    %291 = arith.divf %289, %290 : vector<8x1xf32>
    %cst_124 = arith.constant 9.99999974E-6 : f32
    %292 = vector.broadcast %cst_124 : f32 to vector<8x1xf32>
    %293 = arith.addf %291, %292 : vector<8x1xf32>
    %294 = math.rsqrt %293 : vector<8x1xf32>
    %295 = vector.broadcast %294 : vector<8x1xf32> to vector<8x64xf32>
    %296 = arith.mulf %286, %295 : vector<8x64xf32>
    %297 = vector.broadcast %279 : vector<1x64xf32> to vector<8x64xf32>
    %298 = arith.mulf %296, %297 : vector<8x64xf32>
    %299 = vector.broadcast %280 : vector<1x64xf32> to vector<8x64xf32>
    %300 = arith.addf %298, %299 : vector<8x64xf32>
    %cst_125 = arith.constant 2.000000e-01 : f32
    %301 = vector.broadcast %cst_125 : f32 to vector<8x64xf32>
    %302 = arith.mulf %301, %300 : vector<8x64xf32>
    %303 = arith.maximumf %300, %302 : vector<8x64xf32>
    %304 = tpu.concatenate %303, %135 in 1 : vector<8x64xf32>, vector<8x64xf32> -> vector<8x128xf32>
    %c0_126 = arith.constant 0 : index
    %c0_127 = arith.constant 0 : index
    %305 = vector.load %arg5[%c0_126, %c0_127] : memref<8x128xf32, #tpu.memory_space<vmem>>, vector<8x128xf32>
    tpu.vector_store %arg5[%c0_126, %c0_127], %304 {strides = array<i32>} : memref<8x128xf32, #tpu.memory_space<vmem>>, vector<8x128xf32>,
    return
  }
  func.func @transform_0(%arg0: i32) -> (i32, i32) {
    %c0_i32 = arith.constant 0 : i32
    %c0_i32_0 = arith.constant 0 : i32
    return %arg0, %c0_i32 : i32, i32
  }
  func.func @transform_1(%arg0: i32) -> (i32, i32) {
    %c0_i32 = arith.constant 0 : i32
    %c0_i32_0 = arith.constant 0 : i32
    return %arg0, %c0_i32 : i32, i32
  }
  func.func @transform_2(%arg0: i32) -> (i32, i32, i32) {
    %c0_i32 = arith.constant 0 : i32
    %c0_i32_0 = arith.constant 0 : i32
    %c0_i32_1 = arith.constant 0 : i32
    %c0_i32_2 = arith.constant 0 : i32
    return %c0_i32, %c0_i32_0, %c0_i32_1 : i32, i32, i32
  }
  func.func @transform_3(%arg0: i32) -> (i32, i32) {
    %c0_i32 = arith.constant 0 : i32
    %c0_i32_0 = arith.constant 0 : i32
    %c0_i32_1 = arith.constant 0 : i32
    return %c0_i32, %c0_i32_0 : i32, i32
  }
  func.func @transform_4(%arg0: i32) -> (i32, i32) {
    %c0_i32 = arith.constant 0 : i32
    %c0_i32_0 = arith.constant 0 : i32
    return %arg0, %c0_i32 : i32, i32
  }
}

</mosaic_0001>

<llo_original>
// kernel: forward.1
$region0: #{forward.1}
  #allocation0 [shape = 'u32[]', space=smem, size = 0x4, offset = 0x4, fixed_abs, tag = 'smem constant byte address 0x4 - core index']
  #allocation1 [shape = 'u32[72,128]{1,0:T(1,128)}', space=vmem, size = 0x9000, scoped, tag = 'internal scratch']
  %s0 = inlined_call_operand.vmem [shape: f32[8,64], index: 0, kind: input, shape index: {}]
  %s1 = inlined_call_operand.vmem [shape: f32[8,8], index: 1, kind: input, shape index: {}]
  %s2 = inlined_call_operand.hbm [shape: bf16[10,64,64], index: 2, kind: input, shape index: {}]
  %s3 = inlined_call_operand.vmem [shape: f32[30,64], index: 3, kind: input, shape index: {}]
  %s4 = inlined_call_operand.vmem [shape: f32[8,128], index: 4, kind: output, shape index: {}]
  %s5 = sld [smem:[#allocation0]]
  $region30: #{forward.1} parent=0
    _
  %s7 = ssub.s32 1, %s5
  %s8 = scalar_select 0, %s7, %s5
  $region1: #{forward.1} parent=0
    #allocation2 [shape = 'u8[163840]{0}', space=vmem, size = 0x28000, scoped, tag = 'input window, operand 2, single buffered']
    #allocation3 [shape = 's32[1]{0}', space=sflag, size = 0x4, scoped, tag = 'scoped memory for forward.1']
    %9 = vsyncpa [#allocation3], 0
    // Predicated region
    $region2: #{forward.1} parent=1 // pred_check
      _
    $region3: #{forward.1} parent=1 // pred_check_branch
      %11 = sbr.rel (0) target = $region5
    $region4: #{forward.1} parent=1 // pred_region
      _
    $region5: #{forward.1} parent=1 // pred_fallthru
      _
    // Predicated region
    $region6: #{forward.1} parent=1 // pred_check
      _
    $region7: #{forward.1} parent=1 // pred_check_branch
      %13 = sbr.rel (0) target = $region9
    $region8: #{forward.1} parent=1 // pred_region
      _
    $region9: #{forward.1} parent=1 // pred_fallthru
      _
    // Predicated region
    $region10: #{forward.1} parent=1 // pred_check
      _
    $region11: #{forward.1} parent=1 // pred_check_branch
      %15 = sbr.rel (0) target = $region13
    $region12: #{forward.1} parent=1 // pred_region
      %17 = vsyncadd [#allocation3], 0
      %s18 = sshll.u32 %s2, 4
      %s19 = int_to_ptr.hbm [resolvable:$true] %s18
      %s20 = sshll.u32 [#allocation2], 4
      %s21 = int_to_ptr.vmem [resolvable:$true] %s20
      %26 = dma.hbm_to_vmem [thread:$0]  %s19, 5120, %s21, [#allocation3], 64, 64, 4
    $region13: #{forward.1} parent=1 // pred_fallthru
      _
    // Predicated region
    $region14: #{forward.1} parent=1 // pred_check
      _
    $region15: #{forward.1} parent=1 // pred_check_branch
      %28 = sbr.rel (0) target = $region17
    $region16: #{forward.1} parent=1 // pred_region
      _
    $region17: #{forward.1} parent=1 // pred_fallthru
      _
    // Predicated region
    $region18: #{forward.1} parent=1 // pred_check
      _
    $region19: #{forward.1} parent=1 // pred_check_branch
      %30 = sbr.rel (0) target = $region21
    $region20: #{forward.1} parent=1 // pred_region
      %32 = dma.done [#allocation3], 5120
    $region21: #{forward.1} parent=1 // pred_fallthru
      _
    %v34 = vld [vmem:[%s0] sm:$0xff]
    %v35 = vld [vmem:[#allocation2] sm:$0xf]
    %v36 = vld [vmem:[#allocation2 + $0x4] sm:$0xf]
    %v37 = vld [vmem:[#allocation2 + $0x8] sm:$0xf]
    %v38 = vld [vmem:[#allocation2 + $0xc] sm:$0xf]
    %v39 = vld [vmem:[#allocation2 + $0x10] sm:$0xf]
    %v40 = vld [vmem:[#allocation2 + $0x14] sm:$0xf]
    %v41 = vld [vmem:[#allocation2 + $0x18] sm:$0xf]
    %v42 = vld [vmem:[#allocation2 + $0x1c] sm:$0xf]
    %v43 = vpack.c.bf16 %v34, %v34
    %v44 = vld [vmem:[%s3] sm:$0x1]
    %v45 = vperm.slane %v44, 0
    %v54 = vunpack.c.l.b16 %v35
    %v55 = vunpack.c.l.b16 %v36
    %v56 = vunpack.c.l.b16 %v37
    %v57 = vunpack.c.l.b16 %v38
    %v58 = vunpack.c.l.b16 %v39
    %v59 = vunpack.c.l.b16 %v40
    %v60 = vunpack.c.l.b16 %v41
    %v61 = vunpack.c.l.b16 %v42
    %v62 = vpack.c.b16 %v55, %v54
    %v63 = vpack.c.b16 %v57, %v56
    %v64 = vpack.c.b16 %v59, %v58
    %v65 = vpack.c.b16 %v61, %v60
    %vm70 = vcmask 523264
    %v72 = vsel %vm70, %v43, 0
    %74 = vmatpush.bf16.msra.mxu0 0
    %75 = vmatpush.bf16.msra.mxu0 0
    %76 = vmatpush.bf16.msra.mxu0 0
    %77 = vmatpush.bf16.msra.mxu0 0
    %78 = vmatpush.bf16.msra.mxu0 %v65
    %79 = vmatpush.bf16.msra.mxu0 %v64
    %80 = vmatpush.bf16.msra.mxu0 %v63
    %81 = vmatpush.bf16.msra.mxu0 %v62
    %82 = vmatmul.bf16.gmra.mxu0 %v72
    %v83 = vpop.f32.mrf.mxu0
    %v84 = vadd.f32 %v45, %v83
    %v85 = vpop.f32.mrf.mxu0
    %86 = vdwg.mxu0
    %v87 = vld [vmem:[%s3 + $0x1] sm:$0x1]
    %v88 = vld [vmem:[%s3 + $0x2] sm:$0x1]
    %v89 = vsel %vm70, %v84, 0.0
    %90 = vadd.xlane.f32.xlu0 %v89
    %v91 = vpop.xlane.xlu0 %90
    %v92 = vrcp.pop 64.0
    %v93 = vmul.f32 64.0, %v92
    %v94 = vsub.f32 1.0, %v93
    %v95 = vmul.f32 %v92, %v94
    %v96 = vadd.f32 %v92, %v95
    %vm97 = vweird.f32 %v92
    %v98 = vsel %vm97, %v92, %v96
    %v99 = vmul.f32 %v91, %v98
    %v100 = vsub.f32 %v84, %v99
    %v101 = vmul.f32 %v100, %v100
    %v102 = vsel %vm70, %v101, 0.0
    %103 = vadd.xlane.f32.xlu0 %v102
    %v104 = vpop.xlane.xlu0 %103
    %v105 = vmul.f32 %v104, %v98
    %v106 = vadd.f32 %v105, 1e-05
    %v107 = vrsqrt.pop %v106
    %v108 = vmul.f32 %v107, %v106
    %v109 = vmul.f32 %v108, %v107
    %v110 = vmul.f32 0.5, %v109
    %v111 = vsub.f32 1.5, %v110
    %v112 = vmul.f32 %v107, %v111
    %vm113 = vweird.f32 %v106
    %vm114 = vweird.f32 %v107
    %vm115 = vmor %vm113, %vm114
    %v116 = vsel %vm115, %v107, %v112
    %v117 = vmul.f32 %v100, %v116
    %v118 = vperm.slane %v87, 0
    %v119 = vmul.f32 %v117, %v118
    %v120 = vperm.slane %v88, 0
    %v121 = vadd.f32 %v119, %v120
    %v122 = vmul.f32 %v121, 0.2
    %v123 = vmax.f32 %v121, %v122
    %s124 = scalar_lea.vmem [#allocation2], 32
    %v125 = vld [vmem:[%s124] sm:$0xf]
    %v126 = vld [vmem:[%s124 + $0x4] sm:$0xf]
    %v127 = vld [vmem:[%s124 + $0x8] sm:$0xf]
    %v128 = vld [vmem:[%s124 + $0xc] sm:$0xf]
    %v129 = vld [vmem:[%s124 + $0x10] sm:$0xf]
    %v130 = vld [vmem:[%s124 + $0x14] sm:$0xf]
    %v131 = vld [vmem:[%s124 + $0x18] sm:$0xf]
    %v132 = vld [vmem:[%s124 + $0x1c] sm:$0xf]
    %v133 = vpack.c.bf16 %v123, %v123
    %v134 = vld [vmem:[%s3 + $0x3] sm:$0x1]
    %v135 = vperm.slane %v134, 0
    %v144 = vunpack.c.l.b16 %v125
    %v145 = vunpack.c.l.b16 %v126
    %v146 = vunpack.c.l.b16 %v127
    %v147 = vunpack.c.l.b16 %v128
    %v148 = vunpack.c.l.b16 %v129
    %v149 = vunpack.c.l.b16 %v130
    %v150 = vunpack.c.l.b16 %v131
    %v151 = vunpack.c.l.b16 %v132
    %v152 = vpack.c.b16 %v145, %v144
    %v153 = vpack.c.b16 %v147, %v146
    %v154 = vpack.c.b16 %v149, %v148
    %v155 = vpack.c.b16 %v151, %v150
    %v161 = vsel %vm70, %v133, 0
    %163 = vmatpush.bf16.msra.mxu0 0
    %164 = vmatpush.bf16.msra.mxu0 0
    %165 = vmatpush.bf16.msra.mxu0 0
    %166 = vmatpush.bf16.msra.mxu0 0
    %167 = vmatpush.bf16.msra.mxu0 %v155
    %168 = vmatpush.bf16.msra.mxu0 %v154
    %169 = vmatpush.bf16.msra.mxu0 %v153
    %170 = vmatpush.bf16.msra.mxu0 %v152
    %171 = vmatmul.bf16.gmra.mxu0 %v161
    %v172 = vpop.f32.mrf.mxu0
    %v173 = vadd.f32 %v135, %v172
    %v174 = vpop.f32.mrf.mxu0
    %175 = vdwg.mxu0
    %v176 = vld [vmem:[%s3 + $0x4] sm:$0x1]
    %v177 = vld [vmem:[%s3 + $0x5] sm:$0x1]
    %v178 = vsel %vm70, %v173, 0.0
    %179 = vadd.xlane.f32.xlu0 %v178
    %v180 = vpop.xlane.xlu0 %179
    %v181 = vmul.f32 %v180, %v98
    %v182 = vsub.f32 %v173, %v181
    %v183 = vmul.f32 %v182, %v182
    %v184 = vsel %vm70, %v183, 0.0
    %185 = vadd.xlane.f32.xlu0 %v184
    %v186 = vpop.xlane.xlu0 %185
    %v187 = vmul.f32 %v186, %v98
    %v188 = vadd.f32 %v187, 1e-05
    %v189 = vrsqrt.pop %v188
    %v190 = vmul.f32 %v189, %v188
    %v191 = vmul.f32 %v190, %v189
    %v192 = vmul.f32 0.5, %v191
    %v193 = vsub.f32 1.5, %v192
    %v194 = vmul.f32 %v189, %v193
    %vm195 = vweird.f32 %v188
    %vm196 = vweird.f32 %v189
    %vm197 = vmor %vm195, %vm196
    %v198 = vsel %vm197, %v189, %v194
    %v199 = vmul.f32 %v182, %v198
    %v200 = vperm.slane %v176, 0
    %v201 = vmul.f32 %v199, %v200
    %v202 = vperm.slane %v177, 0
    %v203 = vadd.f32 %v201, %v202
    %v204 = vmul.f32 %v203, 0.2
    %v205 = vmax.f32 %v203, %v204
    %s206 = scalar_lea.vmem [#allocation2], 64
    %v207 = vld [vmem:[%s206] sm:$0xf]
    %v208 = vld [vmem:[%s206 + $0x4] sm:$0xf]
    %v209 = vld [vmem:[%s206 + $0x8] sm:$0xf]
    %v210 = vld [vmem:[%s206 + $0xc] sm:$0xf]
    %v211 = vld [vmem:[%s206 + $0x10] sm:$0xf]
    %v212 = vld [vmem:[%s206 + $0x14] sm:$0xf]
    %v213 = vld [vmem:[%s206 + $0x18] sm:$0xf]
    %v214 = vld [vmem:[%s206 + $0x1c] sm:$0xf]
    %v215 = vpack.c.bf16 %v205, %v205
    %v216 = vld [vmem:[%s3 + $0x6] sm:$0x1]
    %v217 = vperm.slane %v216, 0
    %v226 = vunpack.c.l.b16 %v207
    %v227 = vunpack.c.l.b16 %v208
    %v228 = vunpack.c.l.b16 %v209
    %v229 = vunpack.c.l.b16 %v210
    %v230 = vunpack.c.l.b16 %v211
    %v231 = vunpack.c.l.b16 %v212
    %v232 = vunpack.c.l.b16 %v213
    %v233 = vunpack.c.l.b16 %v214
    %v234 = vpack.c.b16 %v227, %v226
    %v235 = vpack.c.b16 %v229, %v228
    %v236 = vpack.c.b16 %v231, %v230
    %v237 = vpack.c.b16 %v233, %v232
    %v243 = vsel %vm70, %v215, 0
    %245 = vmatpush.bf16.msra.mxu0 0
    %246 = vmatpush.bf16.msra.mxu0 0
    %247 = vmatpush.bf16.msra.mxu0 0
    %248 = vmatpush.bf16.msra.mxu0 0
    %249 = vmatpush.bf16.msra.mxu0 %v237
    %250 = vmatpush.bf16.msra.mxu0 %v236
    %251 = vmatpush.bf16.msra.mxu0 %v235
    %252 = vmatpush.bf16.msra.mxu0 %v234
    %253 = vmatmul.bf16.gmra.mxu0 %v243
    %v254 = vpop.f32.mrf.mxu0
    %v255 = vadd.f32 %v217, %v254
    %v256 = vpop.f32.mrf.mxu0
    %257 = vdwg.mxu0
    %v258 = vld [vmem:[%s3 + $0x7] sm:$0x1]
    %v259 = vld [vmem:[%s3 + $0x8] sm:$0x1]
    %vm260 = vcmask 261120
    %v261 = vsel %vm260, %v255, 0.0
    %262 = vadd.xlane.f32.xlu0 %v261
    %v263 = vpop.xlane.xlu0 %262
    %v264 = vrcp.pop 32.0
    %v265 = vmul.f32 32.0, %v264
    %v266 = vsub.f32 1.0, %v265
    %v267 = vmul.f32 %v264, %v266
    %v268 = vadd.f32 %v264, %v267
    %vm269 = vweird.f32 %v264
    %v270 = vsel %vm269, %v264, %v268
    %v271 = vmul.f32 %v263, %v270
    %v272 = vsub.f32 %v255, %v271
    %v273 = vmul.f32 %v272, %v272
    %v274 = vsel %vm260, %v273, 0.0
    %275 = vadd.xlane.f32.xlu0 %v274
    %v276 = vpop.xlane.xlu0 %275
    %v277 = vmul.f32 %v276, %v270
    %v278 = vadd.f32 %v277, 1e-05
    %v279 = vrsqrt.pop %v278
    %v280 = vmul.f32 %v279, %v278
    %v281 = vmul.f32 %v280, %v279
    %v282 = vmul.f32 0.5, %v281
    %v283 = vsub.f32 1.5, %v282
    %v284 = vmul.f32 %v279, %v283
    %vm285 = vweird.f32 %v278
    %vm286 = vweird.f32 %v279
    %vm287 = vmor %vm285, %vm286
    %v288 = vsel %vm287, %v279, %v284
    %v289 = vmul.f32 %v272, %v288
    %v290 = vperm.slane %v258, 0
    %v291 = vmul.f32 %v289, %v290
    %v292 = vperm.slane %v259, 0
    %v293 = vadd.f32 %v291, %v292
    %v294 = vmul.f32 %v293, 0.2
    %v295 = vmax.f32 %v293, %v294
    %s296 = scalar_lea.vmem [#allocation2], 96
    %v297 = vld [vmem:[%s296] sm:$0xf]
    %v298 = vld [vmem:[%s296 + $0x4] sm:$0xf]
    %v299 = vld [vmem:[%s296 + $0x8] sm:$0xf]
    %v300 = vld [vmem:[%s296 + $0xc] sm:$0xf]
    %v301 = vpack.c.bf16 %v295, %v295
    %v302 = vld [vmem:[%s3 + $0x9] sm:$0x1]
    %v303 = vperm.slane %v302, 0
    %v308 = vunpack.c.l.b16 %v297
    %v309 = vunpack.c.l.b16 %v298
    %v310 = vunpack.c.l.b16 %v299
    %v311 = vunpack.c.l.b16 %v300
    %v312 = vpack.c.b16 %v309, %v308
    %v313 = vpack.c.b16 %v311, %v310
    %v317 = vsel %vm260, %v301, 0
    %319 = vmatpush.bf16.msra.mxu0 0
    %320 = vmatpush.bf16.msra.mxu0 0
    %321 = vmatpush.bf16.msra.mxu0 0
    %322 = vmatpush.bf16.msra.mxu0 0
    %323 = vmatpush.bf16.msra.mxu0 0
    %324 = vmatpush.bf16.msra.mxu0 0
    %325 = vmatpush.bf16.msra.mxu0 %v313
    %326 = vmatpush.bf16.msra.mxu0 %v312
    %327 = vmatmul.bf16.gmra.mxu0 %v317
    %v328 = vpop.f32.mrf.mxu0
    %v329 = vadd.f32 %v303, %v328
    %v330 = vpop.f32.mrf.mxu0
    %331 = vdwg.mxu0
    %v332 = vld [vmem:[%s3 + $0xa] sm:$0x1]
    %v333 = vld [vmem:[%s3 + $0xb] sm:$0x1]
    %vm334 = vcmask 130048
    %v335 = vsel %vm334, %v329, 0.0
    %336 = vadd.xlane.f32.xlu0 %v335
    %v337 = vpop.xlane.xlu0 %336
    %v338 = vrcp.pop 16.0
    %v339 = vmul.f32 16.0, %v338
    %v340 = vsub.f32 1.0, %v339
    %v341 = vmul.f32 %v338, %v340
    %v342 = vadd.f32 %v338, %v341
    %vm343 = vweird.f32 %v338
    %v344 = vsel %vm343, %v338, %v342
    %v345 = vmul.f32 %v337, %v344
    %v346 = vsub.f32 %v329, %v345
    %v347 = vmul.f32 %v346, %v346
    %v348 = vsel %vm334, %v347, 0.0
    %349 = vadd.xlane.f32.xlu0 %v348
    %v350 = vpop.xlane.xlu0 %349
    %v351 = vmul.f32 %v350, %v344
    %v352 = vadd.f32 %v351, 1e-05
    %v353 = vrsqrt.pop %v352
    %v354 = vmul.f32 %v353, %v352
    %v355 = vmul.f32 %v354, %v353
    %v356 = vmul.f32 0.5, %v355
    %v357 = vsub.f32 1.5, %v356
    %v358 = vmul.f32 %v353, %v357
    %vm359 = vweird.f32 %v352
    %vm360 = vweird.f32 %v353
    %vm361 = vmor %vm359, %vm360
    %v362 = vsel %vm361, %v353, %v358
    %v363 = vmul.f32 %v346, %v362
    %v364 = vperm.slane %v332, 0
    %v365 = vmul.f32 %v363, %v364
    %v366 = vperm.slane %v333, 0
    %v367 = vadd.f32 %v365, %v366
    %v368 = vmul.f32 %v367, 0.2
    %v369 = vmax.f32 %v367, %v368
    %v370 = vpack.c.bf16 %v369, %v369
    %s371 = scalar_lea.vmem [#allocation2], 128
    %v372 = vld [vmem:[%s371] sm:$0xf]
    %v373 = vld [vmem:[%s371 + $0x4] sm:$0xf]
    %v374 = vld [vmem:[%s3 + $0xc] sm:$0x1]
    %v375 = vperm.slane %v374, 0
    %v378 = vunpack.c.l.b16 %v372
    %v379 = vunpack.c.l.b16 %v373
    %v380 = vpack.c.b16 %v379, %v378
    %v383 = vsel %vm334, %v370, 0
    %385 = vmatpush.bf16.msra.mxu0 0
    %386 = vmatpush.bf16.msra.mxu0 0
    %387 = vmatpush.bf16.msra.mxu0 0
    %388 = vmatpush.bf16.msra.mxu0 0
    %389 = vmatpush.bf16.msra.mxu0 0
    %390 = vmatpush.bf16.msra.mxu0 0
    %391 = vmatpush.bf16.msra.mxu0 0
    %392 = vmatpush.bf16.msra.mxu0 %v380
    %393 = vmatmul.bf16.gmra.mxu0 %v383
    %v394 = vpop.f32.mrf.mxu0
    %v395 = vadd.f32 %v375, %v394
    %v396 = vpop.f32.mrf.mxu0
    %397 = vdwg.mxu0
    %v398 = vmul.f32 %v395, 0.5
    %v399 = vmul.f32 %v398, 1.442695
    %v400 = vpow.pop %v399
    %v401 = vld [vmem:[%s1] sm:$0xff]
    %403 = vrot.lane.b32.xlu0 %v401, 8
    %v404 = vpop.permute.xlu0 %403
    %v406 = vmul.f32 %v400, %v404
    %408 = vrot.lane.b32.xlu0 %v406, 120
    %v409 = vpop.permute.xlu0 %408
    %v411 = vadd.f32 %v395, %v409
    %s412 = scalar_lea.vmem [#allocation2], 160
    %v413 = vld [vmem:[%s412] sm:$0xf]
    %v414 = vpack.c.bf16 %v411, %v411
    %v415 = vld [vmem:[%s3 + $0xf] sm:$0x1]
    %v416 = vperm.slane %v415, 0
    %vm417 = vcmask 64512
    %v419 = vsel %vm417, %v414, 0
    %vm421 = vcmask 1043456
    %v423 = vsel %vm421, %v413, 0
    %425 = vmatpush.bf16.msra.mxu0 0
    %426 = vmatpush.bf16.msra.mxu0 0
    %427 = vmatpush.bf16.msra.mxu0 0
    %428 = vmatpush.bf16.msra.mxu0 0
    %429 = vmatpush.bf16.msra.mxu0 0
    %430 = vmatpush.bf16.msra.mxu0 0
    %431 = vmatpush.bf16.msra.mxu0 0
    %432 = vmatpush.bf16.msra.mxu0 %v423
    %433 = vmatmul.bf16.gmra.mxu0 %v419
    %v434 = vpop.f32.mrf.mxu0
    %v435 = vadd.f32 %v416, %v434
    %v436 = vpop.f32.mrf.mxu0
    %437 = vdwg.mxu0
    %v438 = vld [vmem:[%s3 + $0x10] sm:$0x1]
    %v439 = vld [vmem:[%s3 + $0x11] sm:$0x1]
    %v440 = vsel %vm334, %v435, 0.0
    %441 = vadd.xlane.f32.xlu0 %v440
    %v442 = vpop.xlane.xlu0 %441
    %v443 = vmul.f32 %v442, %v344
    %v444 = vsub.f32 %v435, %v443
    %v445 = vmul.f32 %v444, %v444
    %v446 = vsel %vm334, %v445, 0.0
    %447 = vadd.xlane.f32.xlu0 %v446
    %v448 = vpop.xlane.xlu0 %447
    %v449 = vmul.f32 %v448, %v344
    %v450 = vadd.f32 %v449, 1e-05
    %v451 = vrsqrt.pop %v450
    %v452 = vmul.f32 %v451, %v450
    %v453 = vmul.f32 %v452, %v451
    %v454 = vmul.f32 0.5, %v453
    %v455 = vsub.f32 1.5, %v454
    %v456 = vmul.f32 %v451, %v455
    %vm457 = vweird.f32 %v450
    %vm458 = vweird.f32 %v451
    %vm459 = vmor %vm457, %vm458
    %v460 = vsel %vm459, %v451, %v456
    %v461 = vmul.f32 %v444, %v460
    %v462 = vperm.slane %v438, 0
    %v463 = vmul.f32 %v461, %v462
    %v464 = vperm.slane %v439, 0
    %v465 = vadd.f32 %v463, %v464
    %v466 = vmul.f32 %v465, 0.2
    %v467 = vmax.f32 %v465, %v466
    %s468 = scalar_lea.vmem [#allocation2], 192
    %v469 = vld [vmem:[%s468] sm:$0xf]
    %v470 = vld [vmem:[%s468 + $0x4] sm:$0xf]
    %v471 = vpack.c.bf16 %v467, %v467
    %v472 = vld [vmem:[%s3 + $0x12] sm:$0x1]
    %v473 = vperm.slane %v472, 0
    %v476 = vunpack.c.l.b16 %v469
    %v477 = vunpack.c.l.b16 %v470
    %v478 = vpack.c.b16 %v477, %v476
    %v481 = vsel %vm334, %v471, 0
    %483 = vmatpush.bf16.msra.mxu0 0
    %484 = vmatpush.bf16.msra.mxu0 0
    %485 = vmatpush.bf16.msra.mxu0 0
    %486 = vmatpush.bf16.msra.mxu0 0
    %487 = vmatpush.bf16.msra.mxu0 0
    %488 = vmatpush.bf16.msra.mxu0 0
    %489 = vmatpush.bf16.msra.mxu0 0
    %490 = vmatpush.bf16.msra.mxu0 %v478
    %491 = vmatmul.bf16.gmra.mxu0 %v481
    %v492 = vpop.f32.mrf.mxu0
    %v493 = vadd.f32 %v473, %v492
    %v494 = vpop.f32.mrf.mxu0
    %495 = vdwg.mxu0
    %v496 = vld [vmem:[%s3 + $0x13] sm:$0x1]
    %v497 = vld [vmem:[%s3 + $0x14] sm:$0x1]
    %v498 = vsel %vm260, %v493, 0.0
    %499 = vadd.xlane.f32.xlu0 %v498
    %v500 = vpop.xlane.xlu0 %499
    %v501 = vmul.f32 %v500, %v270
    %v502 = vsub.f32 %v493, %v501
    %v503 = vmul.f32 %v502, %v502
    %v504 = vsel %vm260, %v503, 0.0
    %505 = vadd.xlane.f32.xlu0 %v504
    %v506 = vpop.xlane.xlu0 %505
    %v507 = vmul.f32 %v506, %v270
    %v508 = vadd.f32 %v507, 1e-05
    %v509 = vrsqrt.pop %v508
    %v510 = vmul.f32 %v509, %v508
    %v511 = vmul.f32 %v510, %v509
    %v512 = vmul.f32 0.5, %v511
    %v513 = vsub.f32 1.5, %v512
    %v514 = vmul.f32 %v509, %v513
    %vm515 = vweird.f32 %v508
    %vm516 = vweird.f32 %v509
    %vm517 = vmor %vm515, %vm516
    %v518 = vsel %vm517, %v509, %v514
    %v519 = vmul.f32 %v502, %v518
    %v520 = vperm.slane %v496, 0
    %v521 = vmul.f32 %v519, %v520
    %v522 = vperm.slane %v497, 0
    %v523 = vadd.f32 %v521, %v522
    %v524 = vmul.f32 %v523, 0.2
    %v525 = vmax.f32 %v523, %v524
    %s526 = scalar_lea.vmem [#allocation2], 224
    %v527 = vld [vmem:[%s526] sm:$0xf]
    %v528 = vld [vmem:[%s526 + $0x4] sm:$0xf]
    %v529 = vld [vmem:[%s526 + $0x8] sm:$0xf]
    %v530 = vld [vmem:[%s526 + $0xc] sm:$0xf]
    %v531 = vpack.c.bf16 %v525, %v525
    %v532 = vld [vmem:[%s3 + $0x15] sm:$0x1]
    %v533 = vperm.slane %v532, 0
    %v538 = vunpack.c.l.b16 %v527
    %v539 = vunpack.c.l.b16 %v528
    %v540 = vunpack.c.l.b16 %v529
    %v541 = vunpack.c.l.b16 %v530
    %v542 = vpack.c.b16 %v539, %v538
    %v543 = vpack.c.b16 %v541, %v540
    %v547 = vsel %vm260, %v531, 0
    %549 = vmatpush.bf16.msra.mxu0 0
    %550 = vmatpush.bf16.msra.mxu0 0
    %551 = vmatpush.bf16.msra.mxu0 0
    %552 = vmatpush.bf16.msra.mxu0 0
    %553 = vmatpush.bf16.msra.mxu0 0
    %554 = vmatpush.bf16.msra.mxu0 0
    %555 = vmatpush.bf16.msra.mxu0 %v543
    %556 = vmatpush.bf16.msra.mxu0 %v542
    %557 = vmatmul.bf16.gmra.mxu0 %v547
    %v558 = vpop.f32.mrf.mxu0
    %v559 = vadd.f32 %v533, %v558
    %v560 = vpop.f32.mrf.mxu0
    %561 = vdwg.mxu0
    %v562 = vld [vmem:[%s3 + $0x16] sm:$0x1]
    %v563 = vld [vmem:[%s3 + $0x17] sm:$0x1]
    %v564 = vsel %vm70, %v559, 0.0
    %565 = vadd.xlane.f32.xlu0 %v564
    %v566 = vpop.xlane.xlu0 %565
    %v567 = vmul.f32 %v566, %v98
    %v568 = vsub.f32 %v559, %v567
    %v569 = vmul.f32 %v568, %v568
    %v570 = vsel %vm70, %v569, 0.0
    %571 = vadd.xlane.f32.xlu0 %v570
    %v572 = vpop.xlane.xlu0 %571
    %v573 = vmul.f32 %v572, %v98
    %v574 = vadd.f32 %v573, 1e-05
    %v575 = vrsqrt.pop %v574
    %v576 = vmul.f32 %v575, %v574
    %v577 = vmul.f32 %v576, %v575
    %v578 = vmul.f32 0.5, %v577
    %v579 = vsub.f32 1.5, %v578
    %v580 = vmul.f32 %v575, %v579
    %vm581 = vweird.f32 %v574
    %vm582 = vweird.f32 %v575
    %vm583 = vmor %vm581, %vm582
    %v584 = vsel %vm583, %v575, %v580
    %v585 = vmul.f32 %v568, %v584
    %v586 = vperm.slane %v562, 0
    %v587 = vmul.f32 %v585, %v586
    %v588 = vperm.slane %v563, 0
    %v589 = vadd.f32 %v587, %v588
    %v590 = vmul.f32 %v589, 0.2
    %v591 = vmax.f32 %v589, %v590
    %s592 = scalar_lea.vmem [#allocation2], 256
    %v593 = vld [vmem:[%s592] sm:$0xf]
    %v594 = vld [vmem:[%s592 + $0x4] sm:$0xf]
    %v595 = vld [vmem:[%s592 + $0x8] sm:$0xf]
    %v596 = vld [vmem:[%s592 + $0xc] sm:$0xf]
    %v597 = vld [vmem:[%s592 + $0x10] sm:$0xf]
    %v598 = vld [vmem:[%s592 + $0x14] sm:$0xf]
    %v599 = vld [vmem:[%s592 + $0x18] sm:$0xf]
    %v600 = vld [vmem:[%s592 + $0x1c] sm:$0xf]
    %v601 = vpack.c.bf16 %v591, %v591
    %v602 = vld [vmem:[%s3 + $0x18] sm:$0x1]
    %v603 = vperm.slane %v602, 0
    %v612 = vunpack.c.l.b16 %v593
    %v613 = vunpack.c.l.b16 %v594
    %v614 = vunpack.c.l.b16 %v595
    %v615 = vunpack.c.l.b16 %v596
    %v616 = vunpack.c.l.b16 %v597
    %v617 = vunpack.c.l.b16 %v598
    %v618 = vunpack.c.l.b16 %v599
    %v619 = vunpack.c.l.b16 %v600
    %v620 = vpack.c.b16 %v613, %v612
    %v621 = vpack.c.b16 %v615, %v614
    %v622 = vpack.c.b16 %v617, %v616
    %v623 = vpack.c.b16 %v619, %v618
    %v629 = vsel %vm70, %v601, 0
    %631 = vmatpush.bf16.msra.mxu0 0
    %632 = vmatpush.bf16.msra.mxu0 0
    %633 = vmatpush.bf16.msra.mxu0 0
    %634 = vmatpush.bf16.msra.mxu0 0
    %635 = vmatpush.bf16.msra.mxu0 %v623
    %636 = vmatpush.bf16.msra.mxu0 %v622
    %637 = vmatpush.bf16.msra.mxu0 %v621
    %638 = vmatpush.bf16.msra.mxu0 %v620
    %639 = vmatmul.bf16.gmra.mxu0 %v629
    %v640 = vpop.f32.mrf.mxu0
    %v641 = vadd.f32 %v603, %v640
    %v642 = vpop.f32.mrf.mxu0
    %643 = vdwg.mxu0
    %v644 = vld [vmem:[%s3 + $0x19] sm:$0x1]
    %v645 = vld [vmem:[%s3 + $0x1a] sm:$0x1]
    %v646 = vsel %vm70, %v641, 0.0
    %647 = vadd.xlane.f32.xlu0 %v646
    %v648 = vpop.xlane.xlu0 %647
    %v649 = vmul.f32 %v648, %v98
    %v650 = vsub.f32 %v641, %v649
    %v651 = vmul.f32 %v650, %v650
    %v652 = vsel %vm70, %v651, 0.0
    %653 = vadd.xlane.f32.xlu0 %v652
    %v654 = vpop.xlane.xlu0 %653
    %v655 = vmul.f32 %v654, %v98
    %v656 = vadd.f32 %v655, 1e-05
    %v657 = vrsqrt.pop %v656
    %v658 = vmul.f32 %v657, %v656
    %v659 = vmul.f32 %v658, %v657
    %v660 = vmul.f32 0.5, %v659
    %v661 = vsub.f32 1.5, %v660
    %v662 = vmul.f32 %v657, %v661
    %vm663 = vweird.f32 %v656
    %vm664 = vweird.f32 %v657
    %vm665 = vmor %vm663, %vm664
    %v666 = vsel %vm665, %v657, %v662
    %v667 = vmul.f32 %v650, %v666
    %v668 = vperm.slane %v644, 0
    %v669 = vmul.f32 %v667, %v668
    %v670 = vperm.slane %v645, 0
    %v671 = vadd.f32 %v669, %v670
    %v672 = vmul.f32 %v671, 0.2
    %v673 = vmax.f32 %v671, %v672
    %s674 = scalar_lea.vmem [#allocation2], 288
    %v675 = vld [vmem:[%s674] sm:$0xf]
    %v676 = vld [vmem:[%s674 + $0x4] sm:$0xf]
    %v677 = vld [vmem:[%s674 + $0x8] sm:$0xf]
    %v678 = vld [vmem:[%s674 + $0xc] sm:$0xf]
    %v679 = vld [vmem:[%s674 + $0x10] sm:$0xf]
    %v680 = vld [vmem:[%s674 + $0x14] sm:$0xf]
    %v681 = vld [vmem:[%s674 + $0x18] sm:$0xf]
    %v682 = vld [vmem:[%s674 + $0x1c] sm:$0xf]
    %v683 = vpack.c.bf16 %v673, %v673
    %v684 = vld [vmem:[%s3 + $0x1b] sm:$0x1]
    %v685 = vperm.slane %v684, 0
    %v694 = vunpack.c.l.b16 %v675
    %v695 = vunpack.c.l.b16 %v676
    %v696 = vunpack.c.l.b16 %v677
    %v697 = vunpack.c.l.b16 %v678
    %v698 = vunpack.c.l.b16 %v679
    %v699 = vunpack.c.l.b16 %v680
    %v700 = vunpack.c.l.b16 %v681
    %v701 = vunpack.c.l.b16 %v682
    %v702 = vpack.c.b16 %v695, %v694
    %v703 = vpack.c.b16 %v697, %v696
    %v704 = vpack.c.b16 %v699, %v698
    %v705 = vpack.c.b16 %v701, %v700
    %v711 = vsel %vm70, %v683, 0
    %713 = vmatpush.bf16.msra.mxu0 0
    %714 = vmatpush.bf16.msra.mxu0 0
    %715 = vmatpush.bf16.msra.mxu0 0
    %716 = vmatpush.bf16.msra.mxu0 0
    %717 = vmatpush.bf16.msra.mxu0 %v705
    %718 = vmatpush.bf16.msra.mxu0 %v704
    %719 = vmatpush.bf16.msra.mxu0 %v703
    %720 = vmatpush.bf16.msra.mxu0 %v702
    %721 = vmatmul.bf16.gmra.mxu0 %v711
    %v722 = vpop.f32.mrf.mxu0
    %v723 = vadd.f32 %v685, %v722
    %v724 = vpop.f32.mrf.mxu0
    %725 = vdwg.mxu0
    %v726 = vld [vmem:[%s3 + $0x1c] sm:$0x1]
    %v727 = vld [vmem:[%s3 + $0x1d] sm:$0x1]
    %v728 = vsel %vm70, %v723, 0.0
    %729 = vadd.xlane.f32.xlu0 %v728
    %v730 = vpop.xlane.xlu0 %729
    %v731 = vmul.f32 %v730, %v98
    %v732 = vsub.f32 %v723, %v731
    %v733 = vmul.f32 %v732, %v732
    %v734 = vsel %vm70, %v733, 0.0
    %735 = vadd.xlane.f32.xlu0 %v734
    %v736 = vpop.xlane.xlu0 %735
    %v737 = vmul.f32 %v736, %v98
    %v738 = vadd.f32 %v737, 1e-05
    %v739 = vrsqrt.pop %v738
    %v740 = vmul.f32 %v739, %v738
    %v741 = vmul.f32 %v740, %v739
    %v742 = vmul.f32 0.5, %v741
    %v743 = vsub.f32 1.5, %v742
    %v744 = vmul.f32 %v739, %v743
    %vm745 = vweird.f32 %v738
    %vm746 = vweird.f32 %v739
    %vm747 = vmor %vm745, %vm746
    %v748 = vsel %vm747, %v739, %v744
    %v749 = vmul.f32 %v732, %v748
    %v750 = vperm.slane %v726, 0
    %v751 = vmul.f32 %v749, %v750
    %v752 = vperm.slane %v727, 0
    %v753 = vadd.f32 %v751, %v752
    %v754 = vmul.f32 %v753, 0.2
    %v755 = vmax.f32 %v753, %v754
    %757 = vrot.lane.b32.xlu0 %v395, 64
    %v758 = vpop.permute.xlu0 %757
    %v760 = vsel %vm70, %v755, %v758
    %761 = vst [vmem:[%s4] sm:$0xff] %v760
    // Predicated region
    $region22: #{forward.1} parent=1 // pred_check
      _
    $region23: #{forward.1} parent=1 // pred_check_branch
      %763 = sbr.rel (0) target = $region25
    $region24: #{forward.1} parent=1 // pred_region
      _
    $region25: #{forward.1} parent=1 // pred_fallthru
      _
    // Predicated region
    $region26: #{forward.1} parent=1 // pred_check
      _
    $region27: #{forward.1} parent=1 // pred_check_branch
      %765 = sbr.rel (0) target = $region29
    $region28: #{forward.1} parent=1 // pred_region
      _
    $region29: #{forward.1} parent=1 // pred_fallthru
      _
    %766 = vsyncpa [#allocation3], 1

</llo_original>
